<compile_context>
chip_gen: v7x
topology: tpu7x:2x2x1
jax: 0.10.0
libtpu: 0.0.40
codegen_flags: <defaults>
</compile_context>

<pallas_src>
import functools

import jax
import jax.numpy as jnp
from jax import lax
from jax.experimental import pallas as pl
from jax.experimental.pallas import tpu as pltpu

_NEG = -1e30  # finite "minus infinity": never wins a max, never creates NaNs


def _custom_loss_kernel(w_ref, y0_ref, y1_ref, o_ref, pad_ref, *,
                        T, T_pad, Bb, eps, min_gap, min_size, max_size):
    """One grid step = Bb batch elements (lanes) x T_pad time steps (sublanes)."""
    neg = jnp.float32(_NEG)

    # Spill region of the shift scratch: positions shifted in from beyond the
    # (padded) time axis read this and can never win the max.
    pad_ref[T_pad:2 * T_pad, :] = jnp.full((T_pad, Bb), neg, dtype=jnp.float32)

    def shift_up(x, d):
        # y[t, :] = x[t + d, :] for t + d < T_pad, else NEG.   (d is static)
        if d <= 0:
            return x
        if d >= T_pad:
            return jnp.full((T_pad, Bb), neg, dtype=jnp.float32)
        pad_ref[:T_pad, :] = x
        return pad_ref[d:d + T_pad, :]

    w = w_ref[...]          # (T_pad, Bb): time along sublanes, batch along lanes
    y0 = y0_ref[...]        # (1, Bb) -> broadcasts along sublanes
    y1 = y1_ref[...]        # (1, Bb)

    t_i = lax.broadcasted_iota(jnp.int32, (T_pad, Bb), 0)
    t_f = t_i.astype(jnp.float32)
    in_range = t_i < T

    # Separable per-position scores (rows, O(T) work per batch element).
    f = jnp.where(in_range,
                  w + 0.5 * jnp.maximum(jnp.abs(y0 - t_f) - eps, 0.0), neg)
    g = jnp.where(in_range,
                  w + 0.5 * jnp.maximum(jnp.abs(y1 - t_f) - eps, 0.0), neg)

    # Window length (in j) searched for every onset i.
    if max_size == float('inf'):
        W = T_pad
    else:
        W = min(int(max_size) - int(min_size), T_pad)

    if W >= 1:
        # Sparse-table windowed max of g: coverage doubles every step.
        m = g
        d = 1
        while 2 * d <= W:
            m = jnp.maximum(m, shift_up(m, d))
            d *= 2
        if d < W:
            m = jnp.maximum(m, shift_up(m, W - d))
        # h[i] = max_{i+min_size <= j < min(i+max_size, T)} g(j)
        h = shift_up(m, min_size)
        cand_loop = jnp.where(t_i >= min_gap, f + h, neg)
    else:
        cand_loop = jnp.full((T_pad, Bb), neg, dtype=jnp.float32)

    # Initial candidate (onset=1, offset=1+min_size), no (T, T) mask needed.
    g_off = shift_up(g, min_size)              # g_off[i] = g(i + min_size)
    cand_init = jnp.where(t_i == 1, f + g_off, neg)

    # Per-batch maximum: sublane (time) reduce -> lane-dense (1, Bb) row.
    best = jnp.max(jnp.maximum(cand_loop, cand_init), axis=0, keepdims=True)
    o_ref[...] = best.reshape(1, 1, Bb)


def custom_loss(w_phi, y, eps=5.0, min_gap=5, min_size=5,
                max_size=float('inf')):
    """Pallas implementation of CustomLoss.forward(w_phi, y, eps)."""
    B, C, T = w_phi.shape
    assert C == 1, "w_phi is expected to be (B, 1, T)"

    Bb = 128                                  # batch elements per grid step (lanes)
    T_pad = ((T + 7) // 8) * 8                # time along sublanes, 8-aligned
    B_pad = ((B + Bb - 1) // Bb) * Bb
    num_blocks = B_pad // Bb

    # Layout plumbing in XLA (outside the kernel): time -> sublanes, batch -> lanes.
    w_t = jnp.transpose(w_phi.astype(jnp.float32).reshape(B, T))   # (T, B)
    w_t = jnp.pad(w_t, ((0, T_pad - T), (0, B_pad - B)))
    y32 = y.astype(jnp.float32)
    y0 = jnp.pad(y32[:, 0].reshape(1, B), ((0, 0), (0, B_pad - B)))
    y1 = jnp.pad(y32[:, 1].reshape(1, B), ((0, 0), (0, B_pad - B)))

    kernel = functools.partial(
        _custom_loss_kernel, T=T, T_pad=T_pad, Bb=Bb, eps=float(eps),
        min_gap=int(min_gap), min_size=int(min_size), max_size=max_size)

    out = pl.pallas_call(
        kernel,
        out_shape=jax.ShapeDtypeStruct((num_blocks, 1, Bb), jnp.float32),
        grid=(num_blocks,),
        in_specs=[
            pl.BlockSpec((T_pad, Bb), lambda gb: (0, gb)),   # w   (time, batch)
            pl.BlockSpec((1, Bb), lambda gb: (0, gb)),       # y[:, 0] (onset target)
            pl.BlockSpec((1, Bb), lambda gb: (0, gb)),       # y[:, 1] (offset target)
        ],
        out_specs=pl.BlockSpec((1, 1, Bb), lambda gb: (gb, 0, 0)),
        scratch_shapes=[pltpu.VMEM((2 * T_pad, Bb), jnp.float32)],  # shift scratch
        compiler_params=pltpu.CompilerParams(
            dimension_semantics=("parallel",)),
    )(w_t, y0, y1)

    per_batch = out.reshape(num_blocks * Bb)[:B]   # per-batch maxima, padding dropped
    return jnp.mean(per_batch)


def _reference_loss(w_phi, y, eps=5.0, min_gap=5, min_size=5,
                    max_size=float('inf')):
    """Direct transcription of the PyTorch forward (for validation)."""
    import numpy as np
    w = np.asarray(w_phi, dtype=np.float64)
    yv = np.asarray(y, dtype=np.float64)
    B, _, T = w.shape
    total = 0.0
    for bid in range(B):
        inp = w[bid].T            # (T, 1)
        onset, offset = 1, 1 + min_size
        out = (inp[onset, 0] + inp[offset, 0]
               + (max(0.0, abs(yv[bid, 0] - onset) - eps)
                  + max(0.0, abs(yv[bid, 1] - offset) - eps)) / 2)
        for i in range(min_gap, T):
            hi = T if max_size == float('inf') else min(int(i + max_size), T)
            for j in range(i + min_size, hi):
                tmp = (inp[i, 0] + inp[j, 0]
                       + (max(0.0, abs(yv[bid, 0] - i) - eps)
                          + max(0.0, abs(yv[bid, 1] - j) - eps)) / 2)
                if tmp > out:
                    out = tmp
        total += out
    return total / B


if __name__ == "__main__":
    import numpy as np

    key = jax.random.PRNGKey(0)
    k_w, k_y = jax.random.split(key)

    B, T = 2, 32
    # w_phi: per-frame segment scores, shape (B, 1, T) as the module expects.
    w_phi = jax.random.normal(k_w, (B, 1, T), dtype=jnp.float32)
    # y: (onset, offset) targets per batch element, shape (B, 2).
    y = jax.random.uniform(k_y, (B, 2), dtype=jnp.float32,
                           minval=0.0, maxval=float(T - 1))

    # Default config (max_size = inf -> suffix-max path).
    loss = jax.block_until_ready(custom_loss(w_phi, y, eps=5.0))
    ref = _reference_loss(np.array(w_phi), np.array(y), eps=5.0)
    np.testing.assert_allclose(float(loss), float(ref), rtol=1e-5, atol=1e-5)

    # Finite max_size (exercises the sliding-window-max path).
    loss2 = jax.block_until_ready(
        custom_loss(w_phi, y, eps=5.0, min_gap=3, min_size=4, max_size=12))
    ref2 = _reference_loss(np.array(w_phi), np.array(y), eps=5.0,
                           min_gap=3, min_size=4, max_size=12)
    np.testing.assert_allclose(float(loss2), float(ref2), rtol=1e-5, atol=1e-5)

    print("KERNEL_OK")
</pallas_src>

<mosaic_0001>
module attributes {stable_mosaic.version = 11 : i64} {
  func.func @_custom_loss_kernel(%arg0: i32, %arg1: memref<32x128xf32, #tpu.memory_space<vmem>>, %arg2: memref<1x128xf32, #tpu.memory_space<vmem>>, %arg3: memref<1x128xf32, #tpu.memory_space<vmem>>, %arg4: memref<1x1x128xf32, #tpu.memory_space<vmem>>, %arg5: memref<64x128xf32, #tpu.memory_space<vmem>>) attributes {dimension_semantics = [#tpu.dimension_semantics<parallel>], iteration_bounds = array<i64: 1>, scalar_prefetch = 0 : i64, scratch_operands = 1 : i64, tpu.core_type = #tpu.core_type<tc>, window_params = [{transform_indices = @transform_0, window_bounds = array<i64: 32, 128>}, {transform_indices = @transform_1, window_bounds = array<i64: 1, 128>}, {transform_indices = @transform_2, window_bounds = array<i64: 1, 128>}, {transform_indices = @transform_3, window_bounds = array<i64: 1, 1, 128>}]} {
    %cst = arith.constant -1.000000e+30 : f32
    %0 = vector.broadcast %cst : f32 to vector<32x128xf32>
    %c32 = arith.constant 32 : index
    %c0 = arith.constant 0 : index
    %1 = vector.load %arg5[%c32, %c0] : memref<64x128xf32, #tpu.memory_space<vmem>>, vector<32x128xf32>
    tpu.vector_store %arg5[%c32, %c0], %0 {strides = array<i32>} : memref<64x128xf32, #tpu.memory_space<vmem>>, vector<32x128xf32>,
    %c0_0 = arith.constant 0 : index
    %c0_1 = arith.constant 0 : index
    %2 = vector.load %arg1[%c0_0, %c0_1] : memref<32x128xf32, #tpu.memory_space<vmem>>, vector<32x128xf32>
    %c0_2 = arith.constant 0 : index
    %c0_3 = arith.constant 0 : index
    %3 = vector.load %arg2[%c0_2, %c0_3] : memref<1x128xf32, #tpu.memory_space<vmem>>, vector<1x128xf32>
    %c0_4 = arith.constant 0 : index
    %c0_5 = arith.constant 0 : index
    %4 = vector.load %arg3[%c0_4, %c0_5] : memref<1x128xf32, #tpu.memory_space<vmem>>, vector<1x128xf32>
    %5 = tpu.iota {dimensions = array<i32: 0>} : vector<32x128xi32>
    %6 = arith.sitofp %5 : vector<32x128xi32> to vector<32x128xf32>
    %c32_i32 = arith.constant 32 : i32
    %7 = vector.broadcast %c32_i32 : i32 to vector<32x128xi32>
    %8 = arith.cmpi slt, %5, %7 : vector<32x128xi32>
    %9 = vector.broadcast %3 : vector<1x128xf32> to vector<32x128xf32>
    %10 = arith.subf %9, %6 : vector<32x128xf32>
    %11 = math.absf %10 : vector<32x128xf32>
    %cst_6 = arith.constant 5.000000e+00 : f32
    %12 = vector.broadcast %cst_6 : f32 to vector<32x128xf32>
    %13 = arith.subf %11, %12 : vector<32x128xf32>
    %cst_7 = arith.constant 0.000000e+00 : f32
    %14 = vector.broadcast %cst_7 : f32 to vector<32x128xf32>
    %15 = arith.maximumf %13, %14 : vector<32x128xf32>
    %cst_8 = arith.constant 5.000000e-01 : f32
    %16 = vector.broadcast %cst_8 : f32 to vector<32x128xf32>
    %17 = arith.mulf %16, %15 : vector<32x128xf32>
    %18 = arith.addf %2, %17 : vector<32x128xf32>
    %cst_9 = arith.constant -1.000000e+30 : f32
    %19 = vector.broadcast %cst_9 : f32 to vector<32x128xf32>
    %20 = arith.select %8, %18, %19 : vector<32x128xi1>, vector<32x128xf32>
    %21 = vector.broadcast %4 : vector<1x128xf32> to vector<32x128xf32>
    %22 = arith.subf %21, %6 : vector<32x128xf32>
    %23 = math.absf %22 : vector<32x128xf32>
    %cst_10 = arith.constant 5.000000e+00 : f32
    %24 = vector.broadcast %cst_10 : f32 to vector<32x128xf32>
    %25 = arith.subf %23, %24 : vector<32x128xf32>
    %cst_11 = arith.constant 0.000000e+00 : f32
    %26 = vector.broadcast %cst_11 : f32 to vector<32x128xf32>
    %27 = arith.maximumf %25, %26 : vector<32x128xf32>
    %cst_12 = arith.constant 5.000000e-01 : f32
    %28 = vector.broadcast %cst_12 : f32 to vector<32x128xf32>
    %29 = arith.mulf %28, %27 : vector<32x128xf32>
    %30 = arith.addf %2, %29 : vector<32x128xf32>
    %cst_13 = arith.constant -1.000000e+30 : f32
    %31 = vector.broadcast %cst_13 : f32 to vector<32x128xf32>
    %32 = arith.select %8, %30, %31 : vector<32x128xi1>, vector<32x128xf32>
    %c0_14 = arith.constant 0 : index
    %c0_15 = arith.constant 0 : index
    %33 = vector.load %arg5[%c0_14, %c0_15] : memref<64x128xf32, #tpu.memory_space<vmem>>, vector<32x128xf32>
    tpu.vector_store %arg5[%c0_14, %c0_15], %32 {strides = array<i32>} : memref<64x128xf32, #tpu.memory_space<vmem>>, vector<32x128xf32>,
    %c1 = arith.constant 1 : index
    %c0_16 = arith.constant 0 : index
    %34 = vector.load %arg5[%c1, %c0_16] : memref<64x128xf32, #tpu.memory_space<vmem>>, vector<32x128xf32>
    %35 = arith.maximumf %32, %34 : vector<32x128xf32>
    %c0_17 = arith.constant 0 : index
    %c0_18 = arith.constant 0 : index
    %36 = vector.load %arg5[%c0_17, %c0_18] : memref<64x128xf32, #tpu.memory_space<vmem>>, vector<32x128xf32>
    tpu.vector_store %arg5[%c0_17, %c0_18], %35 {strides = array<i32>} : memref<64x128xf32, #tpu.memory_space<vmem>>, vector<32x128xf32>,
    %c2 = arith.constant 2 : index
    %c0_19 = arith.constant 0 : index
    %37 = vector.load %arg5[%c2, %c0_19] : memref<64x128xf32, #tpu.memory_space<vmem>>, vector<32x128xf32>
    %38 = arith.maximumf %35, %37 : vector<32x128xf32>
    %c0_20 = arith.constant 0 : index
    %c0_21 = arith.constant 0 : index
    %39 = vector.load %arg5[%c0_20, %c0_21] : memref<64x128xf32, #tpu.memory_space<vmem>>, vector<32x128xf32>
    tpu.vector_store %arg5[%c0_20, %c0_21], %38 {strides = array<i32>} : memref<64x128xf32, #tpu.memory_space<vmem>>, vector<32x128xf32>,
    %c4 = arith.constant 4 : index
    %c0_22 = arith.constant 0 : index
    %40 = vector.load %arg5[%c4, %c0_22] : memref<64x128xf32, #tpu.memory_space<vmem>>, vector<32x128xf32>
    %41 = arith.maximumf %38, %40 : vector<32x128xf32>
    %c0_23 = arith.constant 0 : index
    %c0_24 = arith.constant 0 : index
    %42 = vector.load %arg5[%c0_23, %c0_24] : memref<64x128xf32, #tpu.memory_space<vmem>>, vector<32x128xf32>
    tpu.vector_store %arg5[%c0_23, %c0_24], %41 {strides = array<i32>} : memref<64x128xf32, #tpu.memory_space<vmem>>, vector<32x128xf32>,
    %c8 = arith.constant 8 : index
    %c0_25 = arith.constant 0 : index
    %43 = vector.load %arg5[%c8, %c0_25] : memref<64x128xf32, #tpu.memory_space<vmem>>, vector<32x128xf32>
    %44 = arith.maximumf %41, %43 : vector<32x128xf32>
    %c0_26 = arith.constant 0 : index
    %c0_27 = arith.constant 0 : index
    %45 = vector.load %arg5[%c0_26, %c0_27] : memref<64x128xf32, #tpu.memory_space<vmem>>, vector<32x128xf32>
    tpu.vector_store %arg5[%c0_26, %c0_27], %44 {strides = array<i32>} : memref<64x128xf32, #tpu.memory_space<vmem>>, vector<32x128xf32>,
    %c16 = arith.constant 16 : index
    %c0_28 = arith.constant 0 : index
    %46 = vector.load %arg5[%c16, %c0_28] : memref<64x128xf32, #tpu.memory_space<vmem>>, vector<32x128xf32>
    %47 = arith.maximumf %44, %46 : vector<32x128xf32>
    %c0_29 = arith.constant 0 : index
    %c0_30 = arith.constant 0 : index
    %48 = vector.load %arg5[%c0_29, %c0_30] : memref<64x128xf32, #tpu.memory_space<vmem>>, vector<32x128xf32>
    tpu.vector_store %arg5[%c0_29, %c0_30], %47 {strides = array<i32>} : memref<64x128xf32, #tpu.memory_space<vmem>>, vector<32x128xf32>,
    %c5 = arith.constant 5 : index
    %c0_31 = arith.constant 0 : index
    %49 = vector.load %arg5[%c5, %c0_31] : memref<64x128xf32, #tpu.memory_space<vmem>>, vector<32x128xf32>
    %c5_i32 = arith.constant 5 : i32
    %50 = vector.broadcast %c5_i32 : i32 to vector<32x128xi32>
    %51 = arith.cmpi sge, %5, %50 : vector<32x128xi32>
    %52 = arith.addf %20, %49 : vector<32x128xf32>
    %cst_32 = arith.constant -1.000000e+30 : f32
    %53 = vector.broadcast %cst_32 : f32 to vector<32x128xf32>
    %54 = arith.select %51, %52, %53 : vector<32x128xi1>, vector<32x128xf32>
    %c0_33 = arith.constant 0 : index
    %c0_34 = arith.constant 0 : index
    %55 = vector.load %arg5[%c0_33, %c0_34] : memref<64x128xf32, #tpu.memory_space<vmem>>, vector<32x128xf32>
    tpu.vector_store %arg5[%c0_33, %c0_34], %32 {strides = array<i32>} : memref<64x128xf32, #tpu.memory_space<vmem>>, vector<32x128xf32>,
    %c5_35 = arith.constant 5 : index
    %c0_36 = arith.constant 0 : index
    %56 = vector.load %arg5[%c5_35, %c0_36] : memref<64x128xf32, #tpu.memory_space<vmem>>, vector<32x128xf32>
    %c1_i32 = arith.constant 1 : i32
    %57 = vector.broadcast %c1_i32 : i32 to vector<32x128xi32>
    %58 = arith.cmpi eq, %5, %57 : vector<32x128xi32>
    %59 = arith.addf %20, %56 : vector<32x128xf32>
    %cst_37 = arith.constant -1.000000e+30 : f32
    %60 = vector.broadcast %cst_37 : f32 to vector<32x128xf32>
    %61 = arith.select %58, %59, %60 : vector<32x128xi1>, vector<32x128xf32>
    %62 = arith.maximumf %54, %61 : vector<32x128xf32>
    %cst_38 = arith.constant dense<0xFF800000> : vector<128xf32>
    %63 = vector.multi_reduction <maximumf>, %62, %cst_38 [0] : vector<32x128xf32> to vector<128xf32>
    %64 = vector.shape_cast %63 : vector<128xf32> to vector<1x128xf32>
    %65 = vector.shape_cast %64 : vector<1x128xf32> to vector<1x1x128xf32>
    %c0_39 = arith.constant 0 : index
    %c0_40 = arith.constant 0 : index
    %c0_41 = arith.constant 0 : index
    %66 = vector.load %arg4[%c0_39, %c0_40, %c0_41] : memref<1x1x128xf32, #tpu.memory_space<vmem>>, vector<1x1x128xf32>
    tpu.vector_store %arg4[%c0_39, %c0_40, %c0_41], %65 {strides = array<i32>} : memref<1x1x128xf32, #tpu.memory_space<vmem>>, vector<1x1x128xf32>,
    return
  }
  func.func @transform_0(%arg0: i32) -> (i32, i32) {
    %c0_i32 = arith.constant 0 : i32
    %c0_i32_0 = arith.constant 0 : i32
    return %c0_i32, %arg0 : i32, i32
  }
  func.func @transform_1(%arg0: i32) -> (i32, i32) {
    %c0_i32 = arith.constant 0 : i32
    %c0_i32_0 = arith.constant 0 : i32
    return %c0_i32, %arg0 : i32, i32
  }
  func.func @transform_2(%arg0: i32) -> (i32, i32) {
    %c0_i32 = arith.constant 0 : i32
    %c0_i32_0 = arith.constant 0 : i32
    return %c0_i32, %arg0 : i32, i32
  }
  func.func @transform_3(%arg0: i32) -> (i32, i32, i32) {
    %c0_i32 = arith.constant 0 : i32
    %c0_i32_0 = arith.constant 0 : i32
    %c0_i32_1 = arith.constant 0 : i32
    return %arg0, %c0_i32, %c0_i32_0 : i32, i32, i32
  }
}

</mosaic_0001>

<llo_original>
// kernel: tpu_custom_call.1
$region0: #{tpu_custom_call.1}
  #allocation0 [shape = 'u32[]', space=smem, size = 0x4, offset = 0x4, fixed_abs, tag = 'smem constant byte address 0x4 - core index']
  #allocation1 [shape = 'u32[144,128]{1,0:T(1,128)}', space=vmem, size = 0x12000, scoped, tag = 'internal scratch']
  #allocation2 [shape = 'f32[64,128]{1,0:T(8,128)}', space=vmem, size = 0x8000, scoped, tag = 'scratch operand']
  %s0 = inlined_call_operand.hbm [shape: f32[32,128], index: 0, kind: input, shape index: {}]
  %s1 = inlined_call_operand.vmem [shape: f32[1,128], index: 1, kind: input, shape index: {}]
  %s2 = inlined_call_operand.vmem [shape: f32[1,128], index: 2, kind: input, shape index: {}]
  %s3 = inlined_call_operand.hbm [shape: f32[1,1,128], index: 3, kind: output, shape index: {}]
  %s4 = sld [smem:[#allocation0]]
  $region26: #{tpu_custom_call.1} parent=0
    _
  %s6 = ssub.s32 1, %s4
  %s7 = scalar_select 0, %s6, %s4
  $region1: #{tpu_custom_call.1} parent=0
    #allocation3 [shape = 'u8[16384]{0}', space=vmem, size = 0x4000, scoped, tag = 'input window, operand 0, single buffered']
    #allocation4 [shape = 's32[1]{0}', space=sflag, size = 0x4, scoped, tag = 'scoped memory for tpu_custom_call.1']
    #allocation5 [shape = 's32[1]{0}', space=sflag, size = 0x4, scoped, tag = 'scoped memory for tpu_custom_call.1']
    #allocation6 [shape = 'u8[512]{0}', space=vmem, size = 0x400, scoped, tag = 'output window, operand 0, single buffered']
    %8 = vsyncpa [#allocation4], 0
    %9 = vsyncpa [#allocation5], 0
    // Predicated region
    $region2: #{tpu_custom_call.1} parent=1 // pred_check
      _
    $region3: #{tpu_custom_call.1} parent=1 // pred_check_branch
      %11 = sbr.rel (0) target = $region5
    $region4: #{tpu_custom_call.1} parent=1 // pred_region
      %s13 = ssub.s32 512, 512
      %14 = vsyncadd [#allocation4], %s13
      %s15 = sshll.u32 [#allocation3], 4
      %s16 = int_to_ptr.vmem [resolvable:$true] %s15
      %21 = dma.hbm_to_vmem [thread:$0]  %s0, 512, %s16, [#allocation4], 128, 128, 8
    $region5: #{tpu_custom_call.1} parent=1 // pred_fallthru
      _
    // Predicated region
    $region6: #{tpu_custom_call.1} parent=1 // pred_check
      _
    $region7: #{tpu_custom_call.1} parent=1 // pred_check_branch
      %23 = sbr.rel (0) target = $region9
    $region8: #{tpu_custom_call.1} parent=1 // pred_region
      _
    $region9: #{tpu_custom_call.1} parent=1 // pred_fallthru
      _
    // Predicated region
    $region10: #{tpu_custom_call.1} parent=1 // pred_check
      _
    $region11: #{tpu_custom_call.1} parent=1 // pred_check_branch
      %25 = sbr.rel (0) target = $region13
    $region12: #{tpu_custom_call.1} parent=1 // pred_region
      _
    $region13: #{tpu_custom_call.1} parent=1 // pred_fallthru
      _
    // Predicated region
    $region14: #{tpu_custom_call.1} parent=1 // pred_check
      _
    $region15: #{tpu_custom_call.1} parent=1 // pred_check_branch
      %27 = sbr.rel (0) target = $region17
    $region16: #{tpu_custom_call.1} parent=1 // pred_region
      %28 = dma.done [#allocation4], 512
    $region17: #{tpu_custom_call.1} parent=1 // pred_fallthru
      _
    %29 = vst [vmem:[#allocation2 + $0x20] sm:$0xff] -1e+30
    %30 = vst [vmem:[#allocation2 + $0x28] sm:$0xff] -1e+30
    %31 = vst [vmem:[#allocation2 + $0x30] sm:$0xff] -1e+30
    %32 = vst [vmem:[#allocation2 + $0x38] sm:$0xff] -1e+30
    %v33 = vld [vmem:[#allocation3] sm:$0xff]
    %v34 = vld [vmem:[#allocation3 + $0x8] sm:$0xff]
    %v35 = vld [vmem:[#allocation3 + $0x10] sm:$0xff]
    %v36 = vld [vmem:[#allocation3 + $0x18] sm:$0xff]
    %v37 = vld [vmem:[%s1] sm:$0x1]
    %v38 = vld [vmem:[%s2] sm:$0x1]
    %v39 = vlaneseq
    %v40 = vshrl.u32 %v39, 7
    %v41 = vadd.s32 %v40, 8
    %v42 = vadd.s32 %v40, 16
    %v43 = vadd.s32 %v40, 24
    %v44 = vcvt.s32.f32 %v40
    %v45 = vcvt.s32.f32 %v41
    %v46 = vcvt.s32.f32 %v42
    %v47 = vcvt.s32.f32 %v43
    %vm48 = vcmp.lt.s32.totalorder %v40, 32
    %vm49 = vcmp.lt.s32.totalorder %v41, 32
    %vm50 = vcmp.lt.s32.totalorder %v42, 32
    %vm51 = vcmp.lt.s32.totalorder %v43, 32
    %v53 = vlaneseq
    %v54 = vshrl.u32 %v53, 7
    %v55 = vsub.s32 0, %v54
    %v56 = vrot.slane %v37, %v55
    %v58 = vsub.f32 %v56, %v44
    %v59 = vsub.f32 %v56, %v45
    %v60 = vsub.f32 %v56, %v46
    %v61 = vsub.f32 %v56, %v47
    %v62 = vand.u32 2147483647, %v58
    %v63 = vand.u32 2147483647, %v59
    %v64 = vand.u32 2147483647, %v60
    %v65 = vand.u32 2147483647, %v61
    %v66 = vsub.f32 %v62, 5.0
    %v67 = vsub.f32 %v63, 5.0
    %v68 = vsub.f32 %v64, 5.0
    %v69 = vsub.f32 %v65, 5.0
    %v70 = vmax.f32 %v66, 0.0
    %v71 = vmax.f32 %v67, 0.0
    %v72 = vmax.f32 %v68, 0.0
    %v73 = vmax.f32 %v69, 0.0
    %v74 = vmul.f32 %v70, 0.5
    %v75 = vmul.f32 %v71, 0.5
    %v76 = vmul.f32 %v72, 0.5
    %v77 = vmul.f32 %v73, 0.5
    %v78 = vadd.f32 %v33, %v74
    %v79 = vadd.f32 %v34, %v75
    %v80 = vadd.f32 %v35, %v76
    %v81 = vadd.f32 %v36, %v77
    %v82 = vsel %vm48, %v78, -1e+30
    %v83 = vsel %vm49, %v79, -1e+30
    %v84 = vsel %vm50, %v80, -1e+30
    %v85 = vsel %vm51, %v81, -1e+30
    %v87 = vlaneseq
    %v88 = vshrl.u32 %v87, 7
    %v89 = vsub.s32 0, %v88
    %v90 = vrot.slane %v38, %v89
    %v92 = vsub.f32 %v90, %v44
    %v93 = vsub.f32 %v90, %v45
    %v94 = vsub.f32 %v90, %v46
    %v95 = vsub.f32 %v90, %v47
    %v96 = vand.u32 2147483647, %v92
    %v97 = vand.u32 2147483647, %v93
    %v98 = vand.u32 2147483647, %v94
    %v99 = vand.u32 2147483647, %v95
    %v100 = vsub.f32 %v96, 5.0
    %v101 = vsub.f32 %v97, 5.0
    %v102 = vsub.f32 %v98, 5.0
    %v103 = vsub.f32 %v99, 5.0
    %v104 = vmax.f32 %v100, 0.0
    %v105 = vmax.f32 %v101, 0.0
    %v106 = vmax.f32 %v102, 0.0
    %v107 = vmax.f32 %v103, 0.0
    %v108 = vmul.f32 %v104, 0.5
    %v109 = vmul.f32 %v105, 0.5
    %v110 = vmul.f32 %v106, 0.5
    %v111 = vmul.f32 %v107, 0.5
    %v112 = vadd.f32 %v33, %v108
    %v113 = vadd.f32 %v34, %v109
    %v114 = vadd.f32 %v35, %v110
    %v115 = vadd.f32 %v36, %v111
    %v116 = vsel %vm48, %v112, -1e+30
    %v117 = vsel %vm49, %v113, -1e+30
    %v118 = vsel %vm50, %v114, -1e+30
    %v119 = vsel %vm51, %v115, -1e+30
    %120 = vst [vmem:[#allocation2] sm:$0xff] %v116
    %121 = vst [vmem:[#allocation2 + $0x8] sm:$0xff] %v117
    %122 = vst [vmem:[#allocation2 + $0x10] sm:$0xff] %v118
    %123 = vst [vmem:[#allocation2 + $0x18] sm:$0xff] %v119
    %v124 = vld [vmem:[#allocation2 + $0x1] sm:$0xff]
    %v125 = vld [vmem:[#allocation2 + $0x9] sm:$0xff]
    %v126 = vld [vmem:[#allocation2 + $0x11] sm:$0xff]
    %v127 = vld [vmem:[#allocation2 + $0x19] sm:$0xff]
    %v128 = vmax.f32 %v116, %v124
    %v129 = vmax.f32 %v117, %v125
    %v130 = vmax.f32 %v118, %v126
    %v131 = vmax.f32 %v119, %v127
    %132 = vst [vmem:[#allocation2] sm:$0xff] %v128
    %133 = vst [vmem:[#allocation2 + $0x8] sm:$0xff] %v129
    %134 = vst [vmem:[#allocation2 + $0x10] sm:$0xff] %v130
    %135 = vst [vmem:[#allocation2 + $0x18] sm:$0xff] %v131
    %v136 = vld [vmem:[#allocation2 + $0x2] sm:$0xff]
    %v137 = vld [vmem:[#allocation2 + $0xa] sm:$0xff]
    %v138 = vld [vmem:[#allocation2 + $0x12] sm:$0xff]
    %v139 = vld [vmem:[#allocation2 + $0x1a] sm:$0xff]
    %v140 = vmax.f32 %v128, %v136
    %v141 = vmax.f32 %v129, %v137
    %v142 = vmax.f32 %v130, %v138
    %v143 = vmax.f32 %v131, %v139
    %144 = vst [vmem:[#allocation2] sm:$0xff] %v140
    %145 = vst [vmem:[#allocation2 + $0x8] sm:$0xff] %v141
    %146 = vst [vmem:[#allocation2 + $0x10] sm:$0xff] %v142
    %147 = vst [vmem:[#allocation2 + $0x18] sm:$0xff] %v143
    %v148 = vld [vmem:[#allocation2 + $0x4] sm:$0xff]
    %v149 = vld [vmem:[#allocation2 + $0xc] sm:$0xff]
    %v150 = vld [vmem:[#allocation2 + $0x14] sm:$0xff]
    %v151 = vld [vmem:[#allocation2 + $0x1c] sm:$0xff]
    %v152 = vmax.f32 %v140, %v148
    %v153 = vmax.f32 %v141, %v149
    %v154 = vmax.f32 %v142, %v150
    %v155 = vmax.f32 %v143, %v151
    %156 = vst [vmem:[#allocation2] sm:$0xff] %v152
    %157 = vst [vmem:[#allocation2 + $0x8] sm:$0xff] %v153
    %158 = vst [vmem:[#allocation2 + $0x10] sm:$0xff] %v154
    %159 = vst [vmem:[#allocation2 + $0x18] sm:$0xff] %v155
    %v160 = vld [vmem:[#allocation2 + $0x8] sm:$0xff]
    %v161 = vld [vmem:[#allocation2 + $0x10] sm:$0xff]
    %v162 = vld [vmem:[#allocation2 + $0x18] sm:$0xff]
    %v163 = vld [vmem:[#allocation2 + $0x20] sm:$0xff]
    %v164 = vmax.f32 %v152, %v160
    %v165 = vmax.f32 %v153, %v161
    %v166 = vmax.f32 %v154, %v162
    %v167 = vmax.f32 %v155, %v163
    %168 = vst [vmem:[#allocation2] sm:$0xff] %v164
    %169 = vst [vmem:[#allocation2 + $0x8] sm:$0xff] %v165
    %170 = vst [vmem:[#allocation2 + $0x10] sm:$0xff] %v166
    %171 = vst [vmem:[#allocation2 + $0x18] sm:$0xff] %v167
    %v172 = vld [vmem:[#allocation2 + $0x10] sm:$0xff]
    %v173 = vld [vmem:[#allocation2 + $0x18] sm:$0xff]
    %v174 = vld [vmem:[#allocation2 + $0x20] sm:$0xff]
    %v175 = vld [vmem:[#allocation2 + $0x28] sm:$0xff]
    %v176 = vmax.f32 %v164, %v172
    %v177 = vmax.f32 %v165, %v173
    %v178 = vmax.f32 %v166, %v174
    %v179 = vmax.f32 %v167, %v175
    %180 = vst [vmem:[#allocation2] sm:$0xff] %v176
    %181 = vst [vmem:[#allocation2 + $0x8] sm:$0xff] %v177
    %182 = vst [vmem:[#allocation2 + $0x10] sm:$0xff] %v178
    %183 = vst [vmem:[#allocation2 + $0x18] sm:$0xff] %v179
    %v184 = vld [vmem:[#allocation2 + $0x5] sm:$0xff]
    %v185 = vld [vmem:[#allocation2 + $0xd] sm:$0xff]
    %v186 = vld [vmem:[#allocation2 + $0x15] sm:$0xff]
    %v187 = vld [vmem:[#allocation2 + $0x1d] sm:$0xff]
    %vm188 = vcmp.ge.s32.totalorder %v40, 5
    %vm189 = vcmp.ge.s32.totalorder %v41, 5
    %vm190 = vcmp.ge.s32.totalorder %v42, 5
    %vm191 = vcmp.ge.s32.totalorder %v43, 5
    %v192 = vadd.f32 %v82, %v184
    %v193 = vadd.f32 %v83, %v185
    %v194 = vadd.f32 %v84, %v186
    %v195 = vadd.f32 %v85, %v187
    %v196 = vsel %vm188, %v192, -1e+30
    %v197 = vsel %vm189, %v193, -1e+30
    %v198 = vsel %vm190, %v194, -1e+30
    %v199 = vsel %vm191, %v195, -1e+30
    %200 = vst [vmem:[#allocation2] sm:$0xff] %v116
    %201 = vst [vmem:[#allocation2 + $0x8] sm:$0xff] %v117
    %202 = vst [vmem:[#allocation2 + $0x10] sm:$0xff] %v118
    %203 = vst [vmem:[#allocation2 + $0x18] sm:$0xff] %v119
    %v204 = vld [vmem:[#allocation2 + $0x5] sm:$0xff]
    %v205 = vld [vmem:[#allocation2 + $0xd] sm:$0xff]
    %v206 = vld [vmem:[#allocation2 + $0x15] sm:$0xff]
    %v207 = vld [vmem:[#allocation2 + $0x1d] sm:$0xff]
    %vm208 = vcmp.eq.s32.totalorder %v40, 1
    %vm209 = vcmp.eq.s32.totalorder %v41, 1
    %vm210 = vcmp.eq.s32.totalorder %v42, 1
    %vm211 = vcmp.eq.s32.totalorder %v43, 1
    %v212 = vadd.f32 %v82, %v204
    %v213 = vadd.f32 %v83, %v205
    %v214 = vadd.f32 %v84, %v206
    %v215 = vadd.f32 %v85, %v207
    %v216 = vsel %vm208, %v212, -1e+30
    %v217 = vsel %vm209, %v213, -1e+30
    %v218 = vsel %vm210, %v214, -1e+30
    %v219 = vsel %vm211, %v215, -1e+30
    %v220 = vmax.f32 %v196, %v216
    %v221 = vmax.f32 %v197, %v217
    %v222 = vmax.f32 %v198, %v218
    %v223 = vmax.f32 %v199, %v219
    %v224 = vmax.f32 %v220, %v221
    %v225 = vmax.f32 %v222, %v223
    %v226 = vmax.f32 %v224, %v225
    %v227 = vrot.slane %v226, 4
    %v228 = vmax.f32 %v226, %v227
    %v229 = vrot.slane %v228, 2
    %v230 = vmax.f32 %v228, %v229
    %v231 = vrot.slane %v230, 1
    %v232 = vmax.f32 %v230, %v231
    %233 = vst [vmem:[#allocation6] sm:$0x1] %v232
    // Predicated region
    $region18: #{tpu_custom_call.1} parent=1 // pred_check
      _
    $region19: #{tpu_custom_call.1} parent=1 // pred_check_branch
      %235 = sbr.rel (0) target = $region21
    $region20: #{tpu_custom_call.1} parent=1 // pred_region
      %s237 = ssub.s32 16, 16
      %238 = vsyncadd [#allocation5], %s237
      %s240 = sshll.u32 [#allocation6], 4
      %s241 = int_to_ptr.vmem [resolvable:$true] %s240
      %243 = dma.vmem_to_hbm [thread:$0]  %s241, 16, %s3, [#allocation5]
    $region21: #{tpu_custom_call.1} parent=1 // pred_fallthru
      _
    // Predicated region
    $region22: #{tpu_custom_call.1} parent=1 // pred_check
      _
    $region23: #{tpu_custom_call.1} parent=1 // pred_check_branch
      %245 = sbr.rel (0) target = $region25
    $region24: #{tpu_custom_call.1} parent=1 // pred_region
      %246 = dma.done [#allocation5], 16
    $region25: #{tpu_custom_call.1} parent=1 // pred_fallthru
      _
    %247 = vsyncpa [#allocation4], 1
    %248 = vsyncpa [#allocation5], 1

</llo_original>
